<compile_context>
chip_gen: v7x
topology: tpu7x:2x2x1
jax: 0.10.0
libtpu: 0.0.40
codegen_flags: <defaults>
</compile_context>

<pallas_src>
import jax
import jax.numpy as jnp
from jax import lax
from jax.experimental import pallas as pl
from jax.experimental.pallas import tpu as pltpu

H1, H2 = 128, 64  # hidden sizes of the value MLP


def _round_up(n, m):
    return ((n + m - 1) // m) * m


def _num_tensorcores():
    """Best-effort chip query: 2 on v7x-class chips (2 TC/chip), else 1."""
    try:
        kind = jax.devices()[0].device_kind.lower()
    except Exception:
        return 1
    return 2 if ("v7" in kind or "tpu7" in kind) else 1


def value_net_kernel(x_ref, p1_ref, p2_ref, o_ref):
    """Fused 3-layer MLP forward for one batch tile.

    x_ref : (TB, D)     input rows
    p1_ref: (D+1, 128)  [W1 ; b1]
    p2_ref: (131, 64)   [W2 ; b2 ; w3 ; b3*ones]
    o_ref : (1, 1, TB)  lane-dense critic values for this tile
    """
    d = x_ref.shape[1]
    h1_dim = p1_ref.shape[1]          # 128
    h2_dim = p2_ref.shape[1]          # 64

    # Layer 1: (TB,D)@(D,128) on the MXU; bias as a broadcast VPU add
    # (no wrapper-side ones-column concat -> no extra HBM pass over x).
    h1 = jnp.dot(x_ref[...], p1_ref[0:d, :],
                 preferred_element_type=jnp.float32)
    h1 = jnp.maximum(h1 + p1_ref[d:d + 1, :], 0.0)

    # Layer 2: (TB,128)@(128,64).
    h2 = jnp.dot(h1, p2_ref[0:h1_dim, :],
                 preferred_element_type=jnp.float32)
    h2 = jnp.maximum(h2 + p2_ref[h1_dim:h1_dim + 1, :], 0.0)

    # Layer 3 (64 -> 1): w3 . h2^T as an NT dot_general so the result lands
    # directly lane-dense as (., TB) — no 1-lane-wide masked stores and no
    # column->row relayout.  w3 is sublane-broadcast to 8 rows so the MXU M
    # dim is tile-aligned; the extra rows cost nothing (MXU granularity) and
    # are discarded.
    w3 = jnp.broadcast_to(p2_ref[h1_dim + 1:h1_dim + 2, :], (8, h2_dim))
    b3 = p2_ref[h1_dim + 2:h1_dim + 3, 0:1]                      # (1, 1)
    v = lax.dot_general(w3, h2, (((1,), (1,)), ((), ())),
                        preferred_element_type=jnp.float32)      # (8, TB)
    o_ref[...] = (v[0:1, :] + b3)[None].astype(o_ref.dtype)      # (1, 1, TB)


def value_network_forward(x, packed_params, *, block_b=1024, num_splits=None):
    """x: (B, state_dim) f32 -> (B, 1) f32 critic value."""
    p1, p2 = packed_params
    B, D = x.shape
    assert p1.shape == (D + 1, H1), p1.shape
    assert p2.shape == (H1 + 3, H2), p2.shape

    if num_splits is None:
        num_splits = _num_tensorcores()

    # Batch tile: as large as practical (per-grid-step fixed overhead ~0.35 µs
    # dominates this kernel), but on 2-TC chips (v7x) clamp so the parallel
    # batch grid has >= 2 steps and both TensorCores get work.
    tb = _round_up(max(block_b, 8), 8)
    if num_splits > 1:
        tb = min(tb, _round_up(pl.cdiv(B, num_splits), 8))
    if B <= tb:
        tb = B                      # single full-extent block (any B allowed)
    nb = pl.cdiv(B, tb)             # last block may be partial; Pallas masks it

    cost = pl.CostEstimate(
        flops=2 * B * (D * H1 + H1 * H2 + H2),
        transcendentals=0,
        bytes_accessed=(x.size * x.dtype.itemsize
                        + p1.size * p1.dtype.itemsize
                        + p2.size * p2.dtype.itemsize
                        + B * 4),
    )

    out = pl.pallas_call(
        value_net_kernel,
        out_shape=jax.ShapeDtypeStruct((nb, 1, tb), jnp.float32),
        grid=(nb,),
        in_specs=[
            pl.BlockSpec((tb, D), lambda i: (i, 0)),      # batch-tiled input
            pl.BlockSpec(p1.shape, lambda i: (0, 0)),     # weights pinned in VMEM
            pl.BlockSpec(p2.shape, lambda i: (0, 0)),
        ],
        out_specs=pl.BlockSpec((1, 1, tb), lambda i: (i, 0, 0)),  # lane-dense rows
        compiler_params=pltpu.CompilerParams(
            dimension_semantics=("parallel",)),
        cost_estimate=cost,
    )(x, p1, p2)

    # Lane-dense (nb, 1, tb) slab -> (B, 1); rows produced from padded /
    # out-of-range input rows land at positions >= B and are sliced off here.
    return out.reshape(nb * tb)[:B].reshape(B, 1)


def init_params(key, state_dim):
    """PyTorch nn.Linear default init: U[-1/sqrt(fan_in), +1/sqrt(fan_in)]."""
    dims = [(state_dim, H1), (H1, H2), (H2, 1)]
    params = []
    for i, (fan_in, fan_out) in enumerate(dims):
        kw, kb = jax.random.split(jax.random.fold_in(key, i))
        bound = 1.0 / jnp.sqrt(float(fan_in))
        w = jax.random.uniform(kw, (fan_in, fan_out), jnp.float32, -bound, bound)
        b = jax.random.uniform(kb, (1, fan_out), jnp.float32, -bound, bound)
        params += [w, b]
    return tuple(params)


def pack_params(params):
    """Pack the 6 Linear tensors into 2 f32 slabs (fewer DMA descriptors).

    p1 = [W1 ; b1]                  -> (state_dim + 1, 128)
    p2 = [W2 ; b2 ; w3 ; b3*ones]   -> (131, 64)
    Kept in f32: the whole parameter set is ~36 KB, so bf16 saves nothing
    measurable and would quantize the biases / final head (and v5e's VPU has
    no bf16 anyway).
    """
    w1, b1, w2, b2, w3, b3 = params
    p1 = jnp.concatenate([w1, b1], axis=0).astype(jnp.float32)
    b3_row = jnp.full((1, H2), b3[0, 0], jnp.float32)
    p2 = jnp.concatenate([w2, b2, w3.reshape(1, H2), b3_row],
                         axis=0).astype(jnp.float32)
    return p1, p2


def reference_forward(x, params):
    """Plain-JAX forward matching the PyTorch module exactly."""
    w1, b1, w2, b2, w3, b3 = params
    h1 = jnp.maximum(jnp.dot(x, w1) + b1, 0.0)
    h2 = jnp.maximum(jnp.dot(h1, w2) + b2, 0.0)
    return jnp.dot(h2, w3) + b3


if __name__ == "__main__":
    key = jax.random.PRNGKey(0)
    state_dim = 6  # Acrobot-v1 observation dimension
    kx, kp = jax.random.split(key)
    params = init_params(kp, state_dim)
    packed = pack_params(params)

    def check(batch, **kw):
        x = jax.random.normal(jax.random.fold_in(kx, batch),
                              (batch, state_dim), jnp.float32)
        out = jax.block_until_ready(value_network_forward(x, packed, **kw))
        ref = reference_forward(x, params)
        assert out.shape == (batch, 1), out.shape
        # Tolerance covers default (MXU) matmul precision differences between
        # the fused kernel and the unfused XLA reference.
        err = float(jnp.max(jnp.abs(out - ref)))
        assert jnp.allclose(out, ref, atol=1e-3, rtol=1e-3), err

    check(8)                     # single full-extent block
    check(40, block_b=16)        # multi-step grid + partial (masked) tail block
    check(256, num_splits=2)     # forced 2-way split (v7x 2-TensorCore path)
    check(256)                   # default tiling (one big tile on 1-TC chips)

    print("KERNEL_OK")
</pallas_src>

<mosaic_0001>
module attributes {stable_mosaic.version = 11 : i64} {
  func.func @value_net_kernel(%arg0: i32, %arg1: memref<8x6xf32, #tpu.memory_space<vmem>>, %arg2: memref<7x128xf32, #tpu.memory_space<vmem>>, %arg3: memref<131x64xf32, #tpu.memory_space<vmem>>, %arg4: memref<1x1x8xf32, #tpu.memory_space<vmem>>) attributes {dimension_semantics = [#tpu.dimension_semantics<parallel>], iteration_bounds = array<i64: 1>, scalar_prefetch = 0 : i64, scratch_operands = 0 : i64, tpu.core_type = #tpu.core_type<tc>, window_params = [{transform_indices = @transform_0, window_bounds = array<i64: 8, 6>}, {pipeline_mode = #tpu.pipeline_mode<synchronous>, transform_indices = @transform_1, window_bounds = array<i64: 7, 128>}, {pipeline_mode = #tpu.pipeline_mode<synchronous>, transform_indices = @transform_2, window_bounds = array<i64: 131, 64>}, {transform_indices = @transform_3, window_bounds = array<i64: 1, 1, 8>}]} {
    %c0 = arith.constant 0 : index
    %c0_0 = arith.constant 0 : index
    %0 = vector.load %arg1[%c0, %c0_0] : memref<8x6xf32, #tpu.memory_space<vmem>>, vector<8x6xf32>
    %c0_1 = arith.constant 0 : index
    %c0_2 = arith.constant 0 : index
    %1 = vector.load %arg2[%c0_1, %c0_2] : memref<7x128xf32, #tpu.memory_space<vmem>>, vector<6x128xf32>
    %cst = arith.constant dense<0.000000e+00> : vector<8x128xf32>
    %2 = tpu.matmul %0, %1, %cst {dimension_numbers = #tpu.dot_dimension_numbers<[1], [0], [0], [1], [0, 0, 1, 1], [], []>} : vector<8x6xf32>, vector<6x128xf32>, vector<8x128xf32> -> vector<8x128xf32>
    %c6 = arith.constant 6 : index
    %c0_3 = arith.constant 0 : index
    %3 = vector.load %arg2[%c6, %c0_3] : memref<7x128xf32, #tpu.memory_space<vmem>>, vector<1x128xf32>
    %4 = vector.broadcast %3 : vector<1x128xf32> to vector<8x128xf32>
    %5 = arith.addf %2, %4 : vector<8x128xf32>
    %cst_4 = arith.constant 0.000000e+00 : f32
    %6 = vector.broadcast %cst_4 : f32 to vector<8x128xf32>
    %7 = arith.maximumf %5, %6 : vector<8x128xf32>
    %c0_5 = arith.constant 0 : index
    %c0_6 = arith.constant 0 : index
    %8 = vector.load %arg3[%c0_5, %c0_6] : memref<131x64xf32, #tpu.memory_space<vmem>>, vector<128x64xf32>
    %cst_7 = arith.constant dense<0.000000e+00> : vector<8x64xf32>
    %9 = tpu.matmul %7, %8, %cst_7 {dimension_numbers = #tpu.dot_dimension_numbers<[1], [0], [0], [1], [0, 0, 1, 1], [], []>} : vector<8x128xf32>, vector<128x64xf32>, vector<8x64xf32> -> vector<8x64xf32>
    %c128 = arith.constant 128 : index
    %c0_8 = arith.constant 0 : index
    %10 = vector.load %arg3[%c128, %c0_8] : memref<131x64xf32, #tpu.memory_space<vmem>>, vector<1x64xf32>
    %11 = vector.broadcast %10 : vector<1x64xf32> to vector<8x64xf32>
    %12 = arith.addf %9, %11 : vector<8x64xf32>
    %cst_9 = arith.constant 0.000000e+00 : f32
    %13 = vector.broadcast %cst_9 : f32 to vector<8x64xf32>
    %14 = arith.maximumf %12, %13 : vector<8x64xf32>
    %c129 = arith.constant 129 : index
    %c0_10 = arith.constant 0 : index
    %15 = vector.load %arg3[%c129, %c0_10] : memref<131x64xf32, #tpu.memory_space<vmem>>, vector<1x64xf32>
    %16 = vector.shape_cast %15 : vector<1x64xf32> to vector<1x64xf32>
    %17 = vector.broadcast %16 : vector<1x64xf32> to vector<8x64xf32>
    %c130 = arith.constant 130 : index
    %c0_11 = arith.constant 0 : index
    %18 = vector.load %arg3[%c130, %c0_11] : memref<131x64xf32, #tpu.memory_space<vmem>>, vector<1x1xf32>
    %cst_12 = arith.constant dense<0.000000e+00> : vector<8x8xf32>
    %19 = tpu.matmul %17, %14, %cst_12 {dimension_numbers = #tpu.dot_dimension_numbers<[1], [1], [0], [0], [0, 0, 1, 0], [], []>} : vector<8x64xf32>, vector<8x64xf32>, vector<8x8xf32> -> vector<8x8xf32>
    %20 = vector.extract_strided_slice %19 {offsets = [0, 0], sizes = [1, 8], strides = [1, 1]} : vector<8x8xf32> to vector<1x8xf32>
    %21 = vector.broadcast %18 : vector<1x1xf32> to vector<1x8xf32>
    %22 = arith.addf %20, %21 : vector<1x8xf32>
    %23 = vector.shape_cast %22 : vector<1x8xf32> to vector<1x1x8xf32>
    %c0_13 = arith.constant 0 : index
    %c0_14 = arith.constant 0 : index
    %c0_15 = arith.constant 0 : index
    %24 = vector.load %arg4[%c0_13, %c0_14, %c0_15] : memref<1x1x8xf32, #tpu.memory_space<vmem>>, vector<1x1x8xf32>
    tpu.vector_store %arg4[%c0_13, %c0_14, %c0_15], %23 {strides = array<i32>} : memref<1x1x8xf32, #tpu.memory_space<vmem>>, vector<1x1x8xf32>,
    return
  }
  func.func @transform_0(%arg0: i32) -> (i32, i32) {
    %c0_i32 = arith.constant 0 : i32
    %c0_i32_0 = arith.constant 0 : i32
    return %arg0, %c0_i32 : i32, i32
  }
  func.func @transform_1(%arg0: i32) -> (i32, i32) {
    %c0_i32 = arith.constant 0 : i32
    %c0_i32_0 = arith.constant 0 : i32
    %c0_i32_1 = arith.constant 0 : i32
    return %c0_i32, %c0_i32_0 : i32, i32
  }
  func.func @transform_2(%arg0: i32) -> (i32, i32) {
    %c0_i32 = arith.constant 0 : i32
    %c0_i32_0 = arith.constant 0 : i32
    %c0_i32_1 = arith.constant 0 : i32
    return %c0_i32, %c0_i32_0 : i32, i32
  }
  func.func @transform_3(%arg0: i32) -> (i32, i32, i32) {
    %c0_i32 = arith.constant 0 : i32
    %c0_i32_0 = arith.constant 0 : i32
    %c0_i32_1 = arith.constant 0 : i32
    return %arg0, %c0_i32, %c0_i32_0 : i32, i32, i32
  }
}

</mosaic_0001>

<llo_original>
// kernel: tpu_custom_call.1
$region0: #{tpu_custom_call.1}
  #allocation0 [shape = 'u32[]', space=smem, size = 0x4, offset = 0x4, fixed_abs, tag = 'smem constant byte address 0x4 - core index']
  #allocation1 [shape = 'u32[144,128]{1,0:T(1,128)}', space=vmem, size = 0x12000, scoped, tag = 'internal scratch']
  %s0 = inlined_call_operand.vmem [shape: f32[8,6], index: 0, kind: input, shape index: {}]
  %s1 = inlined_call_operand.vmem [shape: f32[7,128], index: 1, kind: input, shape index: {}]
  %s2 = inlined_call_operand.vmem [shape: f32[131,64], index: 2, kind: input, shape index: {}]
  %s3 = inlined_call_operand.hbm [shape: f32[1,1,8], index: 3, kind: output, shape index: {}]
  %s4 = sld [smem:[#allocation0]]
  $region22: #{tpu_custom_call.1} parent=0
    _
  %s6 = ssub.s32 1, %s4
  %s7 = scalar_select 0, %s6, %s4
  $region1: #{tpu_custom_call.1} parent=0
    #allocation2 [shape = 'u8[512]{0}', space=vmem, size = 0x400, scoped, tag = 'output window, operand 0, single buffered']
    #allocation3 [shape = 's32[1]{0}', space=sflag, size = 0x4, scoped, tag = 'scoped memory for tpu_custom_call.1']
    %8 = vsyncpa [#allocation3], 0
    // Predicated region
    $region2: #{tpu_custom_call.1} parent=1 // pred_check
      _
    $region3: #{tpu_custom_call.1} parent=1 // pred_check_branch
      %10 = sbr.rel (0) target = $region5
    $region4: #{tpu_custom_call.1} parent=1 // pred_region
      _
    $region5: #{tpu_custom_call.1} parent=1 // pred_fallthru
      _
    // Predicated region
    $region6: #{tpu_custom_call.1} parent=1 // pred_check
      _
    $region7: #{tpu_custom_call.1} parent=1 // pred_check_branch
      %12 = sbr.rel (0) target = $region9
    $region8: #{tpu_custom_call.1} parent=1 // pred_region
      _
    $region9: #{tpu_custom_call.1} parent=1 // pred_fallthru
      _
    // Predicated region
    $region10: #{tpu_custom_call.1} parent=1 // pred_check
      _
    $region11: #{tpu_custom_call.1} parent=1 // pred_check_branch
      %14 = sbr.rel (0) target = $region13
    $region12: #{tpu_custom_call.1} parent=1 // pred_region
      _
    $region13: #{tpu_custom_call.1} parent=1 // pred_fallthru
      _
    %v15 = vld [vmem:[%s0] sm:$0xff]
    %v16 = vld [vmem:[%s1] sm:$0x3f]
    %v17 = vld [vmem:[%s1 + $0x6] sm:$0x1]
    %v18 = vlaneseq
    %v19 = vshrl.u32 %v18, 7
    %v20 = vsub.s32 0, %v19
    %v21 = vrot.slane %v17, %v20
    %vm22 = vcmask 48128
    %v24 = vsel %vm22, %v15, 0
    %vm26 = vcmask 1045504
    %v28 = vsel %vm26, %v16, 0
    %30 = vmatprep.subr.mxu0 0.0
    %31 = vmatpush1.msra.mxu0 %v28
    %32 = vmatprep.subr.mxu0 0.0
    %33 = vmatpush1.msra.mxu0 0.0
    %34 = vmatprep.subr.mxu0 0.0
    %35 = vmatpush1.msra.mxu0 0.0
    %36 = vmatprep.subr.mxu0 0.0
    %37 = vmatpush1.msra.mxu0 0.0
    %38 = vmatprep.subr.mxu0 0.0
    %39 = vmatpush1.msra.mxu0 0.0
    %40 = vmatprep.subr.mxu0 0.0
    %41 = vmatpush1.msra.mxu0 0.0
    %42 = vmatprep.subr.mxu0 0.0
    %43 = vmatpush1.msra.mxu0 0.0
    %44 = vmatprep.subr.mxu0 0.0
    %45 = vmatpush1.msra.mxu0 0.0
    %46 = vmatprep.subr.mxu0 0.0
    %47 = vmatpush1.msra.mxu0 0.0
    %48 = vmatprep.subr.mxu0 0.0
    %49 = vmatpush1.msra.mxu0 0.0
    %50 = vmatprep.subr.mxu0 0.0
    %51 = vmatpush1.msra.mxu0 0.0
    %52 = vmatprep.subr.mxu0 0.0
    %53 = vmatpush1.msra.mxu0 0.0
    %54 = vmatprep.subr.mxu0 0.0
    %55 = vmatpush1.msra.mxu0 0.0
    %56 = vmatprep.subr.mxu0 0.0
    %57 = vmatpush1.msra.mxu0 0.0
    %58 = vmatprep.subr.mxu0 0.0
    %59 = vmatpush1.msra.mxu0 0.0
    %60 = vmatprep.subr.mxu0 0.0
    %61 = vmatpush1.msra.mxu0 0.0
    %62 = vmatprep.subr.mxu0 0.0
    %63 = vmatpush1.msra.mxu0 0.0
    %64 = vmatprep.subr.mxu0 0.0
    %65 = vmatpush1.msra.mxu0 0.0
    %66 = vmatprep.subr.mxu0 0.0
    %67 = vmatpush1.msra.mxu0 0.0
    %68 = vmatprep.subr.mxu0 0.0
    %69 = vmatpush1.msra.mxu0 0.0
    %70 = vmatprep.subr.mxu0 0.0
    %71 = vmatpush1.msra.mxu0 0.0
    %72 = vmatprep.subr.mxu0 0.0
    %73 = vmatpush1.msra.mxu0 0.0
    %74 = vmatprep.subr.mxu0 0.0
    %75 = vmatpush1.msra.mxu0 0.0
    %76 = vmatprep.subr.mxu0 0.0
    %77 = vmatpush1.msra.mxu0 0.0
    %78 = vmatprep.subr.mxu0 0.0
    %79 = vmatpush1.msra.mxu0 0.0
    %80 = vmatprep.subr.mxu0 0.0
    %81 = vmatpush1.msra.mxu0 0.0
    %82 = vmatprep.subr.mxu0 0.0
    %83 = vmatpush1.msra.mxu0 0.0
    %84 = vmatprep.subr.mxu0 0.0
    %85 = vmatpush1.msra.mxu0 0.0
    %86 = vmatprep.subr.mxu0 0.0
    %87 = vmatpush1.msra.mxu0 0.0
    %88 = vmatprep.subr.mxu0 0.0
    %89 = vmatpush1.msra.mxu0 0.0
    %90 = vmatprep.subr.mxu0 0.0
    %91 = vmatpush1.msra.mxu0 0.0
    %92 = vmatprep.subr.mxu0 0.0
    %93 = vmatpush1.msra.mxu0 0.0
    %94 = vmatprep.mubr.f32.mxu0 0.0
    %95 = vmatmul.mubr.f32.gmra.mrb[0].mxu0 %v24
    %v96 = vpop.f32.mrb[0].mxu0
    %v97 = vadd.f32 %v21, %v96
    %v98 = vpop.f32.mrb[0].mxu0
    %99 = vdwg.mxu0
    %v100 = vmax.f32 %v97, 0.0
    %v101 = vld [vmem:[%s2] sm:$0xff]
    %v102 = vld [vmem:[%s2 + $0x8] sm:$0xff]
    %v103 = vld [vmem:[%s2 + $0x10] sm:$0xff]
    %v104 = vld [vmem:[%s2 + $0x18] sm:$0xff]
    %v105 = vld [vmem:[%s2 + $0x20] sm:$0xff]
    %v106 = vld [vmem:[%s2 + $0x28] sm:$0xff]
    %v107 = vld [vmem:[%s2 + $0x30] sm:$0xff]
    %v108 = vld [vmem:[%s2 + $0x38] sm:$0xff]
    %v109 = vld [vmem:[%s2 + $0x40] sm:$0xff]
    %v110 = vld [vmem:[%s2 + $0x48] sm:$0xff]
    %v111 = vld [vmem:[%s2 + $0x50] sm:$0xff]
    %v112 = vld [vmem:[%s2 + $0x58] sm:$0xff]
    %v113 = vld [vmem:[%s2 + $0x60] sm:$0xff]
    %v114 = vld [vmem:[%s2 + $0x68] sm:$0xff]
    %v115 = vld [vmem:[%s2 + $0x70] sm:$0xff]
    %v116 = vld [vmem:[%s2 + $0x78] sm:$0xff]
    %v117 = vld [vmem:[%s2 + $0x80] sm:$0x1]
    %v118 = vlaneseq
    %v119 = vshrl.u32 %v118, 7
    %v120 = vsub.s32 0, %v119
    %v121 = vrot.slane %v117, %v120
    %122 = vmatprep.subr.mxu0 0.0
    %123 = vmatpush1.msra.mxu0 %v101
    %124 = vmatprep.subr.mxu0 0.0
    %125 = vmatpush1.msra.mxu0 %v102
    %126 = vmatprep.subr.mxu0 0.0
    %127 = vmatpush1.msra.mxu0 %v103
    %128 = vmatprep.subr.mxu0 0.0
    %129 = vmatpush1.msra.mxu0 %v104
    %130 = vmatprep.subr.mxu0 0.0
    %131 = vmatpush1.msra.mxu0 %v105
    %132 = vmatprep.subr.mxu0 0.0
    %133 = vmatpush1.msra.mxu0 %v106
    %134 = vmatprep.subr.mxu0 0.0
    %135 = vmatpush1.msra.mxu0 %v107
    %136 = vmatprep.subr.mxu0 0.0
    %137 = vmatpush1.msra.mxu0 %v108
    %138 = vmatprep.subr.mxu0 0.0
    %139 = vmatpush1.msra.mxu0 %v109
    %140 = vmatprep.subr.mxu0 0.0
    %141 = vmatpush1.msra.mxu0 %v110
    %142 = vmatprep.subr.mxu0 0.0
    %143 = vmatpush1.msra.mxu0 %v111
    %144 = vmatprep.subr.mxu0 0.0
    %145 = vmatpush1.msra.mxu0 %v112
    %146 = vmatprep.subr.mxu0 0.0
    %147 = vmatpush1.msra.mxu0 %v113
    %148 = vmatprep.subr.mxu0 0.0
    %149 = vmatpush1.msra.mxu0 %v114
    %150 = vmatprep.subr.mxu0 0.0
    %151 = vmatpush1.msra.mxu0 %v115
    %152 = vmatprep.subr.mxu0 0.0
    %153 = vmatpush1.msra.mxu0 %v116
    %154 = vmatprep.subr.mxu0 0.0
    %155 = vmatpush1.msra.mxu0 0.0
    %156 = vmatprep.subr.mxu0 0.0
    %157 = vmatpush1.msra.mxu0 0.0
    %158 = vmatprep.subr.mxu0 0.0
    %159 = vmatpush1.msra.mxu0 0.0
    %160 = vmatprep.subr.mxu0 0.0
    %161 = vmatpush1.msra.mxu0 0.0
    %162 = vmatprep.subr.mxu0 0.0
    %163 = vmatpush1.msra.mxu0 0.0
    %164 = vmatprep.subr.mxu0 0.0
    %165 = vmatpush1.msra.mxu0 0.0
    %166 = vmatprep.subr.mxu0 0.0
    %167 = vmatpush1.msra.mxu0 0.0
    %168 = vmatprep.subr.mxu0 0.0
    %169 = vmatpush1.msra.mxu0 0.0
    %170 = vmatprep.subr.mxu0 0.0
    %171 = vmatpush1.msra.mxu0 0.0
    %172 = vmatprep.subr.mxu0 0.0
    %173 = vmatpush1.msra.mxu0 0.0
    %174 = vmatprep.subr.mxu0 0.0
    %175 = vmatpush1.msra.mxu0 0.0
    %176 = vmatprep.subr.mxu0 0.0
    %177 = vmatpush1.msra.mxu0 0.0
    %178 = vmatprep.subr.mxu0 0.0
    %179 = vmatpush1.msra.mxu0 0.0
    %180 = vmatprep.subr.mxu0 0.0
    %181 = vmatpush1.msra.mxu0 0.0
    %182 = vmatprep.subr.mxu0 0.0
    %183 = vmatpush1.msra.mxu0 0.0
    %184 = vmatprep.subr.mxu0 0.0
    %185 = vmatpush1.msra.mxu0 0.0
    %186 = vmatprep.mubr.f32.mxu0 0.0
    %187 = vmatmul.mubr.f32.gmra.mrb[0].mxu0 %v100
    %v188 = vpop.f32.mrb[0].mxu0
    %v189 = vadd.f32 %v121, %v188
    %v190 = vpop.f32.mrb[0].mxu0
    %191 = vdwg.mxu0
    %v192 = vmax.f32 %v189, 0.0
    %v193 = vld [vmem:[%s2 + $0x81] sm:$0x1]
    %v194 = vlaneseq
    %v195 = vshrl.u32 %v194, 7
    %v196 = vsub.s32 0, %v195
    %v197 = vrot.slane %v193, %v196
    %v198 = vld [vmem:[%s2 + $0x82] sm:$0x1]
    %vm199 = vcmask 523264
    %v201 = vsel %vm199, %v197, 0
    %v204 = vsel %vm199, %v192, 0
    %206 = vmatprep.subr.mxu0 0.0
    %207 = vmatpush1.xpose.msra.mxu0 %v204
    %208 = vmatprep.subr.mxu0 0.0
    %209 = vmatpush1.xpose.msra.mxu0 0.0
    %210 = vmatprep.subr.mxu0 0.0
    %211 = vmatpush1.xpose.msra.mxu0 0.0
    %212 = vmatprep.subr.mxu0 0.0
    %213 = vmatpush1.xpose.msra.mxu0 0.0
    %214 = vmatprep.subr.mxu0 0.0
    %215 = vmatpush1.xpose.msra.mxu0 0.0
    %216 = vmatprep.subr.mxu0 0.0
    %217 = vmatpush1.xpose.msra.mxu0 0.0
    %218 = vmatprep.subr.mxu0 0.0
    %219 = vmatpush1.xpose.msra.mxu0 0.0
    %220 = vmatprep.subr.mxu0 0.0
    %221 = vmatpush1.xpose.msra.mxu0 0.0
    %222 = vmatprep.subr.mxu0 0.0
    %223 = vmatpush1.xpose.msra.mxu0 0.0
    %224 = vmatprep.subr.mxu0 0.0
    %225 = vmatpush1.xpose.msra.mxu0 0.0
    %226 = vmatprep.subr.mxu0 0.0
    %227 = vmatpush1.xpose.msra.mxu0 0.0
    %228 = vmatprep.subr.mxu0 0.0
    %229 = vmatpush1.xpose.msra.mxu0 0.0
    %230 = vmatprep.subr.mxu0 0.0
    %231 = vmatpush1.xpose.msra.mxu0 0.0
    %232 = vmatprep.subr.mxu0 0.0
    %233 = vmatpush1.xpose.msra.mxu0 0.0
    %234 = vmatprep.subr.mxu0 0.0
    %235 = vmatpush1.xpose.msra.mxu0 0.0
    %236 = vmatprep.subr.mxu0 0.0
    %237 = vmatpush1.xpose.msra.mxu0 0.0
    %238 = vmatprep.subr.mxu0 0.0
    %239 = vmatpush1.xpose.msra.mxu0 0.0
    %240 = vmatprep.subr.mxu0 0.0
    %241 = vmatpush1.xpose.msra.mxu0 0.0
    %242 = vmatprep.subr.mxu0 0.0
    %243 = vmatpush1.xpose.msra.mxu0 0.0
    %244 = vmatprep.subr.mxu0 0.0
    %245 = vmatpush1.xpose.msra.mxu0 0.0
    %246 = vmatprep.subr.mxu0 0.0
    %247 = vmatpush1.xpose.msra.mxu0 0.0
    %248 = vmatprep.subr.mxu0 0.0
    %249 = vmatpush1.xpose.msra.mxu0 0.0
    %250 = vmatprep.subr.mxu0 0.0
    %251 = vmatpush1.xpose.msra.mxu0 0.0
    %252 = vmatprep.subr.mxu0 0.0
    %253 = vmatpush1.xpose.msra.mxu0 0.0
    %254 = vmatprep.subr.mxu0 0.0
    %255 = vmatpush1.xpose.msra.mxu0 0.0
    %256 = vmatprep.subr.mxu0 0.0
    %257 = vmatpush1.xpose.msra.mxu0 0.0
    %258 = vmatprep.subr.mxu0 0.0
    %259 = vmatpush1.xpose.msra.mxu0 0.0
    %260 = vmatprep.subr.mxu0 0.0
    %261 = vmatpush1.xpose.msra.mxu0 0.0
    %262 = vmatprep.subr.mxu0 0.0
    %263 = vmatpush1.xpose.msra.mxu0 0.0
    %264 = vmatprep.subr.mxu0 0.0
    %265 = vmatpush1.xpose.msra.mxu0 0.0
    %266 = vmatprep.subr.mxu0 0.0
    %267 = vmatpush1.xpose.msra.mxu0 0.0
    %268 = vmatprep.subr.mxu0 0.0
    %269 = vmatpush1.xpose.msra.mxu0 0.0
    %270 = vmatprep.mubr.f32.mxu0 0.0
    %271 = vmatmul.mubr.f32.gmra.mrb[0].mxu0 %v201
    %v272 = vpop.f32.mrb[0].mxu0
    %v273 = vadd.f32 0.0, %v272
    %v274 = vpop.f32.mrb[0].mxu0
    %275 = vdwg.mxu0
    %277 = vset.pattern.permute.xlu0 0
    %278 = vperm.xlu0 %277, %v198
    %v279 = vpop.permute.xlu0 %278
    %v281 = vadd.f32 %v273, %v279
    %vm282 = vcmask 57344
    %283 = vst.msk [vmem:[#allocation2] sm:$0x1] %vm282, %v281
    // Predicated region
    $region14: #{tpu_custom_call.1} parent=1 // pred_check
      _
    $region15: #{tpu_custom_call.1} parent=1 // pred_check_branch
      %285 = sbr.rel (0) target = $region17
    $region16: #{tpu_custom_call.1} parent=1 // pred_region
      %s287 = ssub.s32 16, 16
      %288 = vsyncadd [#allocation3], %s287
      %s290 = sshll.u32 [#allocation2], 4
      %s291 = int_to_ptr.vmem [resolvable:$true] %s290
      %293 = dma.vmem_to_hbm [thread:$0]  %s291, 16, %s3, [#allocation3]
    $region17: #{tpu_custom_call.1} parent=1 // pred_fallthru
      _
    // Predicated region
    $region18: #{tpu_custom_call.1} parent=1 // pred_check
      _
    $region19: #{tpu_custom_call.1} parent=1 // pred_check_branch
      %295 = sbr.rel (0) target = $region21
    $region20: #{tpu_custom_call.1} parent=1 // pred_region
      %296 = dma.done [#allocation3], 16
    $region21: #{tpu_custom_call.1} parent=1 // pred_fallthru
      _
    %297 = vsyncpa [#allocation3], 1

</llo_original>
